<compile_context>
chip_gen: v5e
topology: v5e:2x2
jax: 0.10.0
libtpu: 0.0.40
codegen_flags: <defaults>
</compile_context>

<pallas_src>
import jax
import jax.numpy as jnp
from jax.experimental import pallas as pl
from jax.experimental.pallas import tpu as pltpu

HIDDEN = 32     # hidden_size
OUTPUT = 32     # output_size (must equal hidden_size for this forward to be well-defined)
LAYERS = 2      # num_layers
GATES = 4 * HIDDEN          # 128 -> exactly one vreg lane width

# Row layout of the single packed parameter buffer (lanes = 128 = 4*HIDDEN):
ROW_G0 = 0                               # per-token folded layer-0 gates, (OUTPUT, 4H)
ROW_W  = ROW_G0 + OUTPUT                 # 32: w_ih^T for layers 1..L-1, (HIDDEN, 4H) each
ROW_B  = ROW_W + (LAYERS - 1) * HIDDEN   # 64: folded bias (b_ih + b_hh) per upper layer, (1, 4H)
ROW_W2 = ROW_B + (LAYERS - 1)            # 65: folded output matrix, (HIDDEN, OUTPUT) in cols [:OUTPUT]
ROW_B2 = ROW_W2 + HIDDEN                 # 97: folded output bias, real cols [:OUTPUT], pad cols = -1e30
N_ROWS = ((ROW_B2 + 1 + 7) // 8) * 8     # 104 (sublane-aligned)

_NEG_PAD = -1e30  # padding logit for lanes >= OUTPUT (exp underflows to exactly 0)


def decoder_lstm_kernel(tok_ref,   # SMEM (1,) int32 token id
                        p_ref,     # VMEM (N_ROWS, 128) packed parameters
                        out_ref):  # VMEM out (2, 128): row0 = padded log-probs, row1 = [h0|h1|0]
    H = HIDDEN

    # Clamp the token id: dynamic VMEM indexing has no runtime bounds check.
    tok = jnp.clip(tok_ref[0], 0, OUTPUT - 1)

    # Single-step multi-layer LSTM with h0 = c0 = 0:
    #   W_hh @ h_prev vanishes (only b_hh survives, folded into the bias),
    #   c = i * g (forget gate multiplies c_prev == 0, so it is dropped),
    #   and layer 0's entire pre-activation is a host-precomputed table row.
    # Gate column order is [i | f | g | o]; sigmoid-gate columns (i, f, o) were
    # pre-scaled by 0.5 on the host so sigmoid(raw) == 0.5*tanh(gates) + 0.5.
    hs = []
    x = None
    for l in range(LAYERS):
        if l == 0:
            gates = p_ref[pl.ds(ROW_G0 + tok, 1), :]                       # (1, 128)
        else:
            w = p_ref[pl.ds(ROW_W + (l - 1) * H, H), :]                    # (H, 4H)
            b = p_ref[pl.ds(ROW_B + (l - 1), 1), :]                        # (1, 4H)
            gates = jnp.dot(x, w, preferred_element_type=jnp.float32) + b  # (1, 128)
        t = jnp.tanh(gates)                        # one EUP pass over a full vreg
        i = 0.5 * t[:, 0:H] + 0.5                  # sigmoid(input gate)
        g = t[:, 2 * H:3 * H]                      # tanh(cell gate)
        o = 0.5 * t[:, 3 * H:4 * H] + 0.5          # sigmoid(output gate)
        c = i * g                                  # + f * c_prev, but c_prev == 0
        h = o * jnp.tanh(c)                        # (1, H)
        hs.append(h)
        x = h

    # Folded double-Linear: y = x @ (Wout^T Wout^T) + (b Wout^T + b).
    # Padded lanes (>= OUTPUT) carry -1e30 from b2 padding -> exp == 0 exactly,
    # so the log-softmax over the full 128-lane row equals the 32-lane result.
    w2 = p_ref[pl.ds(ROW_W2, H), :]                # (H, 128)
    b2 = p_ref[pl.ds(ROW_B2, 1), :]                # (1, 128)
    y = jnp.dot(x, w2, preferred_element_type=jnp.float32) + b2
    # TODO(synk): PyTorch's LogSoftmax(dim=1) on a 1-D tensor would raise an
    # index error; we take log-softmax over the class axis (the only axis).
    m = jnp.max(y, axis=-1, keepdims=True)
    e = jnp.exp(y - m)
    logp = y - m - jnp.log(jnp.sum(e, axis=-1, keepdims=True))             # (1, 128)

    # Lane-dense merged output: row 0 = padded log-probs,
    # row 1 = [h_layer0 (lanes 0:H) | h_layer1 (lanes H:2H) | zeros].
    hcat = jnp.concatenate(
        hs + [jnp.zeros((1, GATES - LAYERS * H), jnp.float32)], axis=1)    # (1, 128)
    out_ref[0:1, :] = logp
    out_ref[1:2, :] = hcat


def _pallas_forward(token, packed):
    smem = pl.BlockSpec(memory_space=pltpu.MemorySpace.SMEM)
    vmem = pl.BlockSpec(memory_space=pltpu.MemorySpace.VMEM)
    return pl.pallas_call(
        decoder_lstm_kernel,
        out_shape=jax.ShapeDtypeStruct((2, GATES), jnp.float32),
        in_specs=[smem, vmem],
        out_specs=vmem,
    )(token, packed)


@jax.jit
def decoder_lstm_forward(token, hidden_unused, packed):
    # The `hidden` argument is ignored, exactly like the PyTorch forward
    # (it is overwritten by the freshly-computed LSTM hidden state).
    del hidden_unused
    out = _pallas_forward(token, packed)                 # (2, 128)
    logp = out[0, :OUTPUT]                                # (output_size,)
    hidden = out[1, :LAYERS * HIDDEN].reshape(LAYERS, 1, HIDDEN)
    return logp, hidden


def init_raw_params(key):
    """Deterministic synthetic params matching nn.Embedding / nn.LSTM / nn.Linear shapes."""
    H, V, L = HIDDEN, OUTPUT, LAYERS
    k_emb, k_ih, k_ib, k_hb, k_w, k_b = jax.random.split(key, 6)
    bound = 1.0 / jnp.sqrt(jnp.float32(H))
    return dict(
        emb=jax.random.normal(k_emb, (V, H), jnp.float32),                        # nn.Embedding
        w_ih=jax.random.uniform(k_ih, (L, 4 * H, H), jnp.float32, -bound, bound),  # LSTM W_ih
        b_ih=jax.random.uniform(k_ib, (L, 4 * H), jnp.float32, -bound, bound),
        b_hh=jax.random.uniform(k_hb, (L, 4 * H), jnp.float32, -bound, bound),
        # W_hh exists in the module but multiplies h_prev == 0 here, so it never
        # affects the output; only its bias (b_hh) survives and is folded in.
        w_out=jax.random.uniform(k_w, (V, H), jnp.float32, -bound, bound),         # nn.Linear
        b_out=jax.random.uniform(k_b, (V,), jnp.float32, -bound, bound),
    )


def pack_params(raw):
    """Host-side folding + packing into one (N_ROWS, 128) VMEM-friendly buffer."""
    H, V, L = HIDDEN, OUTPUT, LAYERS
    # Invariants the folding relies on (see correctness notes): the doubled
    # output Linear only composes when output_size == hidden_size, and the
    # fused-tanh / padded-softmax tricks assume 4*H == 128 lanes.
    assert V == H, "double-Linear fold requires output_size == hidden_size"
    assert 4 * H == GATES == 128, "gate row must be exactly one vreg lane width"

    # Pre-scale sigmoid-gate columns (i, f, o) by 0.5 so the kernel can use
    # sigmoid(x) = 0.5*tanh(0.5*x) + 0.5 with a single full-vreg tanh.
    scale = jnp.concatenate([jnp.full((H,), 0.5), jnp.full((H,), 0.5),
                             jnp.ones((H,)), jnp.full((H,), 0.5)]).astype(jnp.float32)

    # Layer 0 folded per-token gate table: relu(emb) @ W_ih0^T + b_ih0 + b_hh0.
    x0 = jnp.maximum(raw["emb"], 0.0)                                     # (V, H)
    g0 = (x0 @ raw["w_ih"][0].T + raw["b_ih"][0] + raw["b_hh"][0]) * scale  # (V, 4H)

    # Upper layers (1..L-1): pre-transposed, pre-scaled weights + folded bias.
    w_ih_t = jnp.transpose(raw["w_ih"][1:], (0, 2, 1)) * scale[None, None, :]   # (L-1, H, 4H)
    b_sum = (raw["b_ih"][1:] + raw["b_hh"][1:]) * scale[None, :]                # (L-1, 4H)

    # Fold the doubled output Linear (valid only because OUTPUT == HIDDEN).
    w_out_t = raw["w_out"].T                                # (H, V)
    w2 = w_out_t @ w_out_t                                  # (H, V)
    b2 = raw["b_out"] @ w_out_t + raw["b_out"]              # (V,)

    packed = jnp.zeros((N_ROWS, GATES), jnp.float32)
    packed = packed.at[ROW_G0:ROW_G0 + V, :].set(g0)
    packed = packed.at[ROW_W:ROW_W + (L - 1) * H, :].set(w_ih_t.reshape((L - 1) * H, 4 * H))
    packed = packed.at[ROW_B:ROW_B + (L - 1), :].set(b_sum)
    packed = packed.at[ROW_W2:ROW_W2 + H, :V].set(w2)
    packed = packed.at[ROW_B2, :V].set(b2)
    packed = packed.at[ROW_B2, V:].set(_NEG_PAD)            # pad logits -> exp == 0
    return packed
    # TODO(synk): for a realistic vocab (>> 32) keep the gate table / embedding
    # in HBM and stream only the looked-up row via PrefetchScalarGridSpec +
    # pl.Element instead of holding the whole table in VMEM.


def reference_forward(tok, raw):
    """Pure-JAX reference with the literal (unfolded) PyTorch algebra."""
    H = HIDDEN
    x = jnp.maximum(raw["emb"][tok], 0.0)[None, :]
    hs = []
    for l in range(LAYERS):
        g = x @ raw["w_ih"][l].T + raw["b_ih"][l] + raw["b_hh"][l]
        i = jax.nn.sigmoid(g[:, :H])
        gg = jnp.tanh(g[:, 2 * H:3 * H])
        o = jax.nn.sigmoid(g[:, 3 * H:])
        c = i * gg
        h = o * jnp.tanh(c)
        hs.append(h)
        x = h
    y = x @ raw["w_out"].T + raw["b_out"]
    y = y @ raw["w_out"].T + raw["b_out"]
    logp = jax.nn.log_softmax(y, axis=-1)[0]
    return logp, jnp.concatenate(hs, 0).reshape(LAYERS, 1, H)


if __name__ == "__main__":
    key = jax.random.PRNGKey(0)
    raw = init_raw_params(key)
    packed = pack_params(raw)

    # The PyTorch forward only runs when the token's *value* is 1
    # (it is reused as the batch dim of h0/c0), so we use token id 1.
    token = jnp.array([1], dtype=jnp.int32)
    hidden_in = jnp.zeros((LAYERS, 1, HIDDEN), jnp.float32)  # unused, as in PyTorch

    logp, hidden = decoder_lstm_forward(token, hidden_in, packed)
    jax.block_until_ready((logp, hidden))

    assert logp.shape == (OUTPUT,)
    assert hidden.shape == (LAYERS, 1, HIDDEN)
    assert jnp.isfinite(logp).all()

    ref_logp, ref_hidden = reference_forward(1, raw)
    assert jnp.allclose(logp, ref_logp, atol=1e-3, rtol=1e-3)
    assert jnp.allclose(hidden, ref_hidden, atol=1e-3, rtol=1e-3)
    print("KERNEL_OK")
</pallas_src>

<mosaic_0001>
module attributes {stable_mosaic.version = 11 : i64} {
  func.func @decoder_lstm_kernel(%arg0: memref<1xi32, #tpu.memory_space<smem>>, %arg1: memref<104x128xf32, #tpu.memory_space<vmem>>, %arg2: memref<2x128xf32, #tpu.memory_space<vmem>>) attributes {dimension_semantics = [], scalar_prefetch = 0 : i64, scratch_operands = 0 : i64, tpu.core_type = #tpu.core_type<tc>} {
    %c0 = arith.constant 0 : index
    %0 = memref.load %arg0[%c0] : memref<1xi32, #tpu.memory_space<smem>>
    %c0_i32 = arith.constant 0 : i32
    %c31_i32 = arith.constant 31 : i32
    %1 = arith.maxsi %c0_i32, %0 : i32
    %2 = arith.minsi %c31_i32, %1 : i32
    %c0_i32_0 = arith.constant 0 : i32
    %3 = arith.addi %c0_i32_0, %2 : i32
    %4 = arith.index_cast %3 : i32 to index
    %c0_1 = arith.constant 0 : index
    %5 = vector.load %arg1[%4, %c0_1] : memref<104x128xf32, #tpu.memory_space<vmem>>, vector<1x128xf32>
    %6 = math.tanh %5 : vector<1x128xf32>
    %7 = vector.extract_strided_slice %6 {offsets = [0, 0], sizes = [1, 32], strides = [1, 1]} : vector<1x128xf32> to vector<1x32xf32>
    %cst = arith.constant 5.000000e-01 : f32
    %8 = vector.broadcast %cst : f32 to vector<1x32xf32>
    %9 = arith.mulf %8, %7 : vector<1x32xf32>
    %cst_2 = arith.constant 5.000000e-01 : f32
    %10 = vector.broadcast %cst_2 : f32 to vector<1x32xf32>
    %11 = arith.addf %9, %10 : vector<1x32xf32>
    %12 = vector.extract_strided_slice %6 {offsets = [0, 64], sizes = [1, 32], strides = [1, 1]} : vector<1x128xf32> to vector<1x32xf32>
    %13 = vector.extract_strided_slice %6 {offsets = [0, 96], sizes = [1, 32], strides = [1, 1]} : vector<1x128xf32> to vector<1x32xf32>
    %cst_3 = arith.constant 5.000000e-01 : f32
    %14 = vector.broadcast %cst_3 : f32 to vector<1x32xf32>
    %15 = arith.mulf %14, %13 : vector<1x32xf32>
    %cst_4 = arith.constant 5.000000e-01 : f32
    %16 = vector.broadcast %cst_4 : f32 to vector<1x32xf32>
    %17 = arith.addf %15, %16 : vector<1x32xf32>
    %18 = arith.mulf %11, %12 : vector<1x32xf32>
    %19 = math.tanh %18 : vector<1x32xf32>
    %20 = arith.mulf %17, %19 : vector<1x32xf32>
    %c32 = arith.constant 32 : index
    %c0_5 = arith.constant 0 : index
    %21 = vector.load %arg1[%c32, %c0_5] : memref<104x128xf32, #tpu.memory_space<vmem>>, vector<32x128xf32>
    %c64 = arith.constant 64 : index
    %c0_6 = arith.constant 0 : index
    %22 = vector.load %arg1[%c64, %c0_6] : memref<104x128xf32, #tpu.memory_space<vmem>>, vector<1x128xf32>
    %cst_7 = arith.constant dense<0.000000e+00> : vector<1x128xf32>
    %23 = tpu.matmul %20, %21, %cst_7 {dimension_numbers = #tpu.dot_dimension_numbers<[1], [0], [0], [1], [0, 0, 1, 1], [], []>} : vector<1x32xf32>, vector<32x128xf32>, vector<1x128xf32> -> vector<1x128xf32>
    %24 = arith.addf %23, %22 : vector<1x128xf32>
    %25 = math.tanh %24 : vector<1x128xf32>
    %26 = vector.extract_strided_slice %25 {offsets = [0, 0], sizes = [1, 32], strides = [1, 1]} : vector<1x128xf32> to vector<1x32xf32>
    %cst_8 = arith.constant 5.000000e-01 : f32
    %27 = vector.broadcast %cst_8 : f32 to vector<1x32xf32>
    %28 = arith.mulf %27, %26 : vector<1x32xf32>
    %cst_9 = arith.constant 5.000000e-01 : f32
    %29 = vector.broadcast %cst_9 : f32 to vector<1x32xf32>
    %30 = arith.addf %28, %29 : vector<1x32xf32>
    %31 = vector.extract_strided_slice %25 {offsets = [0, 64], sizes = [1, 32], strides = [1, 1]} : vector<1x128xf32> to vector<1x32xf32>
    %32 = vector.extract_strided_slice %25 {offsets = [0, 96], sizes = [1, 32], strides = [1, 1]} : vector<1x128xf32> to vector<1x32xf32>
    %cst_10 = arith.constant 5.000000e-01 : f32
    %33 = vector.broadcast %cst_10 : f32 to vector<1x32xf32>
    %34 = arith.mulf %33, %32 : vector<1x32xf32>
    %cst_11 = arith.constant 5.000000e-01 : f32
    %35 = vector.broadcast %cst_11 : f32 to vector<1x32xf32>
    %36 = arith.addf %34, %35 : vector<1x32xf32>
    %37 = arith.mulf %30, %31 : vector<1x32xf32>
    %38 = math.tanh %37 : vector<1x32xf32>
    %39 = arith.mulf %36, %38 : vector<1x32xf32>
    %c65 = arith.constant 65 : index
    %c0_12 = arith.constant 0 : index
    %40 = vector.load %arg1[%c65, %c0_12] : memref<104x128xf32, #tpu.memory_space<vmem>>, vector<32x128xf32>
    %c97 = arith.constant 97 : index
    %c0_13 = arith.constant 0 : index
    %41 = vector.load %arg1[%c97, %c0_13] : memref<104x128xf32, #tpu.memory_space<vmem>>, vector<1x128xf32>
    %cst_14 = arith.constant dense<0.000000e+00> : vector<1x128xf32>
    %42 = tpu.matmul %39, %40, %cst_14 {dimension_numbers = #tpu.dot_dimension_numbers<[1], [0], [0], [1], [0, 0, 1, 1], [], []>} : vector<1x32xf32>, vector<32x128xf32>, vector<1x128xf32> -> vector<1x128xf32>
    %43 = arith.addf %42, %41 : vector<1x128xf32>
    %cst_15 = arith.constant dense<0xFF800000> : vector<1xf32>
    %44 = vector.multi_reduction <maximumf>, %43, %cst_15 [1] : vector<1x128xf32> to vector<1xf32>
    %45 = vector.shape_cast %44 : vector<1xf32> to vector<1x1xf32>
    %46 = vector.broadcast %45 : vector<1x1xf32> to vector<1x128xf32>
    %47 = arith.subf %43, %46 : vector<1x128xf32>
    %48 = math.exp %47 : vector<1x128xf32>
    %49 = vector.broadcast %45 : vector<1x1xf32> to vector<1x128xf32>
    %50 = arith.subf %43, %49 : vector<1x128xf32>
    %cst_16 = arith.constant dense<0.000000e+00> : vector<1xf32>
    %51 = vector.multi_reduction <add>, %48, %cst_16 [1] : vector<1x128xf32> to vector<1xf32>
    %52 = vector.shape_cast %51 : vector<1xf32> to vector<1x1xf32>
    %53 = math.log %52 : vector<1x1xf32>
    %54 = vector.broadcast %53 : vector<1x1xf32> to vector<1x128xf32>
    %55 = arith.subf %50, %54 : vector<1x128xf32>
    %cst_17 = arith.constant 0.000000e+00 : f32
    %56 = vector.broadcast %cst_17 : f32 to vector<1x64xf32>
    %57 = tpu.concatenate %20, %39, %56 in 1 : vector<1x32xf32>, vector<1x32xf32>, vector<1x64xf32> -> vector<1x128xf32>
    %c0_18 = arith.constant 0 : index
    %c0_19 = arith.constant 0 : index
    %58 = vector.load %arg2[%c0_18, %c0_19] : memref<2x128xf32, #tpu.memory_space<vmem>>, vector<1x128xf32>
    tpu.vector_store %arg2[%c0_18, %c0_19], %55 {strides = array<i32>} : memref<2x128xf32, #tpu.memory_space<vmem>>, vector<1x128xf32>,
    %c1 = arith.constant 1 : index
    %c0_20 = arith.constant 0 : index
    %59 = vector.load %arg2[%c1, %c0_20] : memref<2x128xf32, #tpu.memory_space<vmem>>, vector<1x128xf32>
    tpu.vector_store %arg2[%c1, %c0_20], %57 {strides = array<i32>} : memref<2x128xf32, #tpu.memory_space<vmem>>, vector<1x128xf32>,
    return
  }
}

</mosaic_0001>

<llo_original>
// kernel: squeeze.3
$region0: #{squeeze.3}
  %s0 = inlined_call_operand.vmem [shape: f32[64], index: 0, kind: input, shape index: {}]
  %s1 = inlined_call_operand.hbm [shape: f32[2,1,32], index: 1, kind: output, shape index: {}]
  $region1: #{squeeze.3} parent=0
    #allocation0 [shape = 'u8[1024]{0}', space=vmem, size = 0x400, scoped, tag = 'operand span for operand 1']
    #allocation1 [shape = 's32[1]{0}', space=sflag, size = 0x4, scoped, tag = 'scoped memory for squeeze.3']
    #allocation2 [shape = 'u8[4096]{0}', space=vmem, size = 0x1000, scoped, tag = 'scoped mem for output reshape']
    #allocation3 [shape = 'u8[4096]{0}', space=vmem, size = 0x1000, scoped, tag = 'scoped mem for input reshape']
    %2 = vsyncpa [#allocation1], 0
    %s4 = ssub.s32 2, 1
    %v5 = vld [vmem:[%s0] sm:%s4]
    %6 = vst [vmem:[#allocation3] sm:%s4] %v5
    %v7 = vld [vmem:[#allocation3] sm:$0x1]
    %vm8 = vcmask 261120
    %9 = vst.msk [vmem:[#allocation2] sm:$0x1] %vm8, %v7
    %v10 = vld [vmem:[#allocation3] sm:$0x1]
    %11 = vrot.lane.b32.xlu0 %v10, 96
    %v12 = vpop.permute.xlu0 %11
    %vm13 = vcmask 261120
    %s14 = scalar_lea.vmem [#allocation2], 1
    %15 = vst.msk [vmem:[%s14] sm:$0x1] %vm13, %v12
    %s17 = ssub.s32 4, 1
    %v18 = vld [vmem:[#allocation2] sm:%s17]
    %s20 = ssub.s32 4, 1
    %21 = vst [vmem:[#allocation0] sm:%s20] %v18
    %23 = vsyncadd [#allocation1], 0
    %s25 = sshll.u32 [#allocation0], 4
    %s26 = int_to_ptr.vmem [resolvable:$true] %s25
    %s27 = sshll.u32 %s1, 4
    %s28 = int_to_ptr.hbm [resolvable:$true] %s27
    %30 = dma.vmem_to_hbm [thread:$0]  %s26, 32, %s28, [#allocation1]
    %32 = dma.done [#allocation1], 32
    %33 = vsyncpa [#allocation1], 1

// kernel: decoder_lstm_forward.1
$region0: #{decoder_lstm_forward.1}
  #allocation0 [shape = 'u32[]', space=smem, size = 0x4, offset = 0x4, fixed_abs, tag = 'smem constant byte address 0x4 - core index']
  #allocation1 [shape = 'u32[72,128]{1,0:T(1,128)}', space=vmem, size = 0x9000, scoped, tag = 'internal scratch']
  #allocation2 [shape = 's32[1]{0:T(128)S(6)}', space=smem, size = 0x200, scoped, tag = 'scoped memory for decoder_lstm_forward.1']
  %s0 = inlined_call_operand.<no memory space> [shape: s32[1], index: 0, kind: input, shape index: {}]
  %s1 = inlined_call_operand.hbm [shape: f32[104,128], index: 1, kind: input, shape index: {}]
  %s2 = inlined_call_operand.vmem [shape: f32[2,128], index: 2, kind: output, shape index: {}]
  %s3 = sld [smem:[#allocation0]]
  $region22: #{decoder_lstm_forward.1} parent=0
    _
  %s5 = ssub.s32 1, %s3
  %s6 = scalar_select 0, %s5, %s3
  %7 = sst [smem:[#allocation2]] %s0
  $region1: #{decoder_lstm_forward.1} parent=0
    #allocation3 [shape = 'u8[53248]{0}', space=vmem, size = 0xd000, scoped, tag = 'input window, operand 1, single buffered']
    #allocation4 [shape = 's32[1]{0}', space=sflag, size = 0x4, scoped, tag = 'scoped memory for decoder_lstm_forward.1']
    %8 = vsyncpa [#allocation4], 0
    // Predicated region
    $region2: #{decoder_lstm_forward.1} parent=1 // pred_check
      _
    $region3: #{decoder_lstm_forward.1} parent=1 // pred_check_branch
      %10 = sbr.rel (0) target = $region5
    $region4: #{decoder_lstm_forward.1} parent=1 // pred_region
      _
    $region5: #{decoder_lstm_forward.1} parent=1 // pred_fallthru
      _
    // Predicated region
    $region6: #{decoder_lstm_forward.1} parent=1 // pred_check
      _
    $region7: #{decoder_lstm_forward.1} parent=1 // pred_check_branch
      %12 = sbr.rel (0) target = $region9
    $region8: #{decoder_lstm_forward.1} parent=1 // pred_region
      %14 = vsyncadd [#allocation4], 0
      %s15 = sshll.u32 %s1, 4
      %s16 = int_to_ptr.hbm [resolvable:$true] %s15
      %s17 = sshll.u32 [#allocation3], 4
      %s18 = int_to_ptr.vmem [resolvable:$true] %s17
      %23 = dma.hbm_to_vmem [thread:$0]  %s16, 1664, %s18, [#allocation4], 128, 128, 8
    $region9: #{decoder_lstm_forward.1} parent=1 // pred_fallthru
      _
    // Predicated region
    $region10: #{decoder_lstm_forward.1} parent=1 // pred_check
      _
    $region11: #{decoder_lstm_forward.1} parent=1 // pred_check_branch
      %25 = sbr.rel (0) target = $region13
    $region12: #{decoder_lstm_forward.1} parent=1 // pred_region
      %27 = dma.done [#allocation4], 1664
    $region13: #{decoder_lstm_forward.1} parent=1 // pred_fallthru
      _
    %s28 = sld [smem:[#allocation2]]
    %p29 = scmp.gt.s32.totalorder %s28, 0
    %s30 = scalar_select %p29, %s28, 0
    %p31 = scmp.lt.s32.totalorder %s30, 31
    %s32 = scalar_select %p31, %s30, 31
    %s33 = scalar_lea.vmem [#allocation3], %s32
    %v34 = vld [vmem:[%s33] sm:$0x1]
    %v35 = vtanh.pop %v34
    %v36 = vmul.f32 %v35, 0.5
    %v37 = vadd.f32 %v36, 0.5
    %39 = vrot.lane.b32.xlu0 %v35, 64
    %v40 = vpop.permute.xlu0 %39
    %v42 = vmul.f32 %v37, %v40
    %v43 = vtanh.pop %v42
    %45 = vrot.lane.b32.xlu0 %v43, 96
    %v46 = vpop.permute.xlu0 %45
    %v48 = vmul.f32 %v37, %v46
    %v49 = vld [vmem:[#allocation3 + $0x20] sm:$0xff]
    %v50 = vld [vmem:[#allocation3 + $0x28] sm:$0xff]
    %v51 = vld [vmem:[#allocation3 + $0x30] sm:$0xff]
    %v52 = vld [vmem:[#allocation3 + $0x38] sm:$0xff]
    %v53 = vld [vmem:[#allocation3 + $0x40] sm:$0x1]
    %55 = vrot.lane.b32.xlu0 %v48, 32
    %v56 = vpop.permute.xlu0 %55
    %vm57 = vcmask 261120
    %v58 = vsel %vm57, %v56, 0
    %60 = vmatpush.msra.mxu0 0.0
    %61 = vmatpush.msra.mxu0 0.0
    %62 = vmatpush.msra.mxu0 0.0
    %63 = vmatpush.msra.mxu0 0.0
    %64 = vmatpush.msra.mxu0 0.0
    %65 = vmatpush.msra.mxu0 0.0
    %66 = vmatpush.msra.mxu0 0.0
    %67 = vmatpush.msra.mxu0 0.0
    %68 = vmatpush.msra.mxu0 0.0
    %69 = vmatpush.msra.mxu0 0.0
    %70 = vmatpush.msra.mxu0 0.0
    %71 = vmatpush.msra.mxu0 0.0
    %72 = vmatpush.msra.mxu0 %v52
    %73 = vmatpush.msra.mxu0 %v51
    %74 = vmatpush.msra.mxu0 %v50
    %75 = vmatpush.msra.mxu0 %v49
    %76 = vmatmul.f32.gmra.mxu0 %v58
    %v77 = vpop.f32.mrf.mxu0
    %v78 = vadd.f32 %v53, %v77
    %79 = vdwg.mxu0
    %v80 = vtanh.pop %v78
    %v81 = vmul.f32 %v80, 0.5
    %v82 = vadd.f32 %v81, 0.5
    %84 = vrot.lane.b32.xlu0 %v80, 64
    %v85 = vpop.permute.xlu0 %84
    %v87 = vmul.f32 %v82, %v85
    %v88 = vtanh.pop %v87
    %90 = vrot.lane.b32.xlu0 %v88, 96
    %v91 = vpop.permute.xlu0 %90
    %v93 = vmul.f32 %v82, %v91
    %v94 = vld [vmem:[#allocation3 + $0x41] sm:$0xff]
    %v95 = vld [vmem:[#allocation3 + $0x49] sm:$0xff]
    %v96 = vld [vmem:[#allocation3 + $0x51] sm:$0xff]
    %v97 = vld [vmem:[#allocation3 + $0x59] sm:$0xff]
    %v98 = vld [vmem:[#allocation3 + $0x61] sm:$0x1]
    %100 = vrot.lane.b32.xlu0 %v93, 32
    %v101 = vpop.permute.xlu0 %100
    %v102 = vsel %vm57, %v101, 0
    %104 = vmatpush.msra.mxu0 0.0
    %105 = vmatpush.msra.mxu0 0.0
    %106 = vmatpush.msra.mxu0 0.0
    %107 = vmatpush.msra.mxu0 0.0
    %108 = vmatpush.msra.mxu0 0.0
    %109 = vmatpush.msra.mxu0 0.0
    %110 = vmatpush.msra.mxu0 0.0
    %111 = vmatpush.msra.mxu0 0.0
    %112 = vmatpush.msra.mxu0 0.0
    %113 = vmatpush.msra.mxu0 0.0
    %114 = vmatpush.msra.mxu0 0.0
    %115 = vmatpush.msra.mxu0 0.0
    %116 = vmatpush.msra.mxu0 %v97
    %117 = vmatpush.msra.mxu0 %v96
    %118 = vmatpush.msra.mxu0 %v95
    %119 = vmatpush.msra.mxu0 %v94
    %120 = vmatmul.f32.gmra.mxu0 %v102
    %v121 = vpop.f32.mrf.mxu0
    %v122 = vadd.f32 %v98, %v121
    %123 = vdwg.mxu0
    %vm124 = vcmask 1040384
    %v125 = vsel %vm124, %v122, -inf
    %126 = vmax.xlane.f32.xlu0 %v125
    %v127 = vpop.xlane.xlu0 %126
    %v128 = vsub.f32 %v122, %v127
    %v129 = vmul.f32 %v128, 1.442695
    %v130 = vpow.pop %v129
    %v131 = vsel %vm124, %v130, 0.0
    %132 = vadd.xlane.f32.xlu0 %v131
    %v133 = vpop.xlane.xlu0 %132
    %v134 = vlog2.pop %v133
    %v135 = vmul.f32 %v134, 0.6931472
    %v136 = vsub.f32 %v128, %v135
    %138 = vrot.lane.b32.xlu0 %v93, 64
    %v139 = vpop.permute.xlu0 %138
    %v141 = vsel %vm57, %v56, %v139
    %vm142 = vcmask 523264
    %v143 = vsel %vm142, %v141, 0.0
    %144 = vst [vmem:[%s2] sm:$0x1] %v136
    %145 = vst [vmem:[%s2 + $0x1] sm:$0x1] %v143
    // Predicated region
    $region14: #{decoder_lstm_forward.1} parent=1 // pred_check
      _
    $region15: #{decoder_lstm_forward.1} parent=1 // pred_check_branch
      %147 = sbr.rel (0) target = $region17
    $region16: #{decoder_lstm_forward.1} parent=1 // pred_region
      _
    $region17: #{decoder_lstm_forward.1} parent=1 // pred_fallthru
      _
    // Predicated region
    $region18: #{decoder_lstm_forward.1} parent=1 // pred_check
      _
    $region19: #{decoder_lstm_forward.1} parent=1 // pred_check_branch
      %149 = sbr.rel (0) target = $region21
    $region20: #{decoder_lstm_forward.1} parent=1 // pred_region
      _
    $region21: #{decoder_lstm_forward.1} parent=1 // pred_fallthru
      _
    %150 = vsyncpa [#allocation4], 1

</llo_original>
